<compile_context>
chip_gen: v7x
topology: tpu7x:2x2x1
jax: 0.10.0
libtpu: 0.0.40
codegen_flags: <defaults>
</compile_context>

<pallas_src>
import functools

import jax
import jax.numpy as jnp
from jax import lax
from jax.experimental import pallas as pl
from jax.experimental.pallas import tpu as pltpu

SMOOTH = 0.01
_SUBLANE = 8
_LANE = 128
# Per-block working-set target; fits every chip's *default* scoped VMEM
# (v5e 16 MiB, v6e/v7x 32 MiB) with headroom.
_VMEM_BUDGET = 10 * 1024 * 1024


def _cdiv(a, b):
    return -(-a // b)


def _round_up(x, m):
    return _cdiv(x, m) * m


def _dice_kernel(idx_ref, cls_hbm, tgt_ref, out_ref, pbuf, sem, *,
                 n_rois, n_cls, tb):
    """One grid step = `tb` ROIs.

    idx_ref : SMEM (N,) int32    per-ROI class index (scalar prefetch)
    cls_hbm : ANY  (N, C, HW)    raw mask logits, left in HBM
    tgt_ref : VMEM (tb, HW)      target-mask block (auto-pipelined)
    out_ref : VMEM (tb, 1)       per-ROI dice coefficient
    pbuf    : VMEM (tb, HW)      gathered class-channel logits (manual DMA)
    sem     : DMA semaphore shared by the tb gather copies
    """
    base = pl.program_id(0) * tb

    # ---- issue the tb gather DMAs (one contiguous (HW,) plane each) ----------
    def _issue(r, carry):
        # Clamp so the ragged last block never issues an OOB HBM DMA.
        row = jnp.minimum(base + r, n_rois - 1)
        cls = jnp.minimum(jnp.maximum(idx_ref[row], 0), n_cls - 1)
        pltpu.make_async_copy(cls_hbm.at[row, cls], pbuf.at[r], sem).start()
        return carry

    lax.fori_loop(0, tb, _issue, 0)

    # ---- target-only reduction overlaps the in-flight gather DMAs ------------
    t = tgt_ref[...].astype(jnp.float32)
    sum_t = jnp.sum(t, axis=-1, keepdims=True)                      # (tb, 1)

    # ---- wait for all tb copies ----------------------------------------------
    # Wait descriptors are size-identical to the issued copies, so the semaphore
    # decrements match the increments exactly (shared-sem pattern).
    def _wait(r, carry):
        pltpu.make_async_copy(cls_hbm.at[0, 0], pbuf.at[r], sem).wait()
        return carry

    lax.fori_loop(0, tb, _wait, 0)

    # ---- dice -----------------------------------------------------------------
    s = jax.nn.sigmoid(pbuf[...].astype(jnp.float32))               # EUP
    inter = jnp.sum(s * t, axis=-1, keepdims=True)                  # (tb, 1)
    sum_s = jnp.sum(s, axis=-1, keepdims=True)                      # (tb, 1)
    dice = (2.0 * inter + SMOOTH) / (sum_s + sum_t + SMOOTH)
    out_ref[...] = dice.astype(out_ref.dtype)


def dice_loss_forward(cls_score, target_mask, class_idx, loss_weight=1.0):
    """Pallas implementation of DiceLoss(use_mask=True).forward.

    cls_score   : (N, C, H, W) float — raw mask logits (NCHW, like PyTorch)
    target_mask : (N, H, W)    float — target masks (the module's `label` arg)
    class_idx   : (N,)         int   — class index per ROI (the `weight` arg)
    returns     : (1,) float32 loss  (matches `dice_loss(...)[None]`)
    """
    N, C, H, W = cls_score.shape
    assert target_mask.shape == (N, H, W)
    HW = H * W

    # Free trailing-dim-collapse reshapes only — no pads, casts or gathers here.
    # NOTE: mask_cross_entropy's `.squeeze(1)` only removes a size-1 H dim; for
    # H > 1 it is a no-op, which is the case implemented here.
    cls3 = cls_score.reshape(N, C, HW)
    tgt2 = target_mask.reshape(N, HW)
    class_idx = class_idx.astype(jnp.int32)

    # ROIs per block: fit the VMEM budget (≈6 full tiles of tb×HW_padded f32),
    # guarantee >=2 blocks when N > 8 (v7x megacore), keep sublane alignment.
    hw_pad = _round_up(HW, _LANE)
    tb_cap = max(_SUBLANE,
                 min(256, (_VMEM_BUDGET // (24 * hw_pad)) // _SUBLANE * _SUBLANE))
    if N <= _SUBLANE:
        tb = N                      # single block; tb == full dim (layout-exempt)
    else:
        n_target = max(2, _cdiv(N, tb_cap))
        tb = _round_up(_cdiv(N, n_target), _SUBLANE)
        if tb >= N:                 # safety guard (cannot trigger for N > 8)
            tb = N
    n_blocks = _cdiv(N, tb)
    np_rows = n_blocks * tb

    vmem_est = 24 * tb * hw_pad
    vmem_limit = int(min(64 * 1024 * 1024,
                         max(32 * 1024 * 1024, 2 * vmem_est)))

    kernel = functools.partial(_dice_kernel, n_rois=N, n_cls=C, tb=tb)

    dice = pl.pallas_call(
        kernel,
        out_shape=jax.ShapeDtypeStruct((np_rows, 1), jnp.float32),
        grid_spec=pltpu.PrefetchScalarGridSpec(
            num_scalar_prefetch=1,
            grid=(n_blocks,),
            in_specs=[
                pl.BlockSpec(memory_space=pl.ANY),                 # cls_score stays in HBM
                pl.BlockSpec((tb, HW), lambda i, idx: (i, 0)),     # target block
            ],
            out_specs=pl.BlockSpec((tb, 1), lambda i, idx: (i, 0)),
            scratch_shapes=[
                pltpu.VMEM((tb, HW), cls_score.dtype),             # gathered logits
                pltpu.SemaphoreType.DMA(()),
            ],
        ),
        compiler_params=pltpu.CompilerParams(
            dimension_semantics=("parallel",),   # blocks are fully independent
            vmem_limit_bytes=vmem_limit,
        ),
    )(class_idx, cls3, tgt2)                                        # (np_rows, 1)

    dice_per_roi = dice[:N, 0]                                      # drop ragged rows
    loss = loss_weight * (1.0 - jnp.mean(dice_per_roi))
    return jnp.reshape(loss, (1,))


def _reference(cls_score, target_mask, class_idx, loss_weight=1.0):
    """Pure-JAX reference mirroring the PyTorch code."""
    N = cls_score.shape[0]
    pred_slice = cls_score[jnp.arange(N), class_idx]                # (N, H, W)
    s = jax.nn.sigmoid(pred_slice.astype(jnp.float32))
    t = target_mask.astype(jnp.float32)
    dice = (2.0 * jnp.sum(s * t, axis=(1, 2)) + SMOOTH) / (
        jnp.sum(s, axis=(1, 2)) + jnp.sum(t, axis=(1, 2)) + SMOOTH)
    return (loss_weight * (1.0 - jnp.mean(dice)))[None]


if __name__ == "__main__":
    # Case 1: small aligned shapes (the canonical example).
    k1, k2, k3 = jax.random.split(jax.random.PRNGKey(0), 3)
    N, C, H, W = 2, 4, 16, 16
    cls_score = jax.random.normal(k1, (N, C, H, W), dtype=jnp.float32)
    target_mask = (jax.random.uniform(k2, (N, H, W)) > 0.5).astype(jnp.float32)
    class_idx = jax.random.randint(k3, (N,), 0, C, dtype=jnp.int32)

    loss = dice_loss_forward(cls_score, target_mask, class_idx, loss_weight=1.0)
    loss = jax.block_until_ready(loss)
    ref = _reference(cls_score, target_mask, class_idx, loss_weight=1.0)
    assert loss.shape == (1,)
    assert jnp.allclose(loss, ref, atol=1e-5, rtol=1e-5), (loss, ref)

    # Case 2: 28x28 masks (HW=784, not a multiple of 128) and N=5 (single block,
    # tb == N < 8).
    k4, k5, k6 = jax.random.split(jax.random.PRNGKey(1), 3)
    N2, C2, H2, W2 = 5, 4, 28, 28
    cls_score2 = jax.random.normal(k4, (N2, C2, H2, W2), dtype=jnp.float32)
    target_mask2 = (jax.random.uniform(k5, (N2, H2, W2)) > 0.5).astype(jnp.float32)
    class_idx2 = jax.random.randint(k6, (N2,), 0, C2, dtype=jnp.int32)

    loss2 = dice_loss_forward(cls_score2, target_mask2, class_idx2, loss_weight=0.5)
    loss2 = jax.block_until_ready(loss2)
    ref2 = _reference(cls_score2, target_mask2, class_idx2, loss_weight=0.5)
    assert loss2.shape == (1,)
    assert jnp.allclose(loss2, ref2, atol=1e-5, rtol=1e-5), (loss2, ref2)

    # Case 3: N=12 -> two blocks of tb=8 with a ragged last block (row clamping
    # + garbage rows sliced off before the mean), HW=196.
    k7, k8, k9 = jax.random.split(jax.random.PRNGKey(2), 3)
    N3, C3, H3, W3 = 12, 3, 14, 14
    cls_score3 = jax.random.normal(k7, (N3, C3, H3, W3), dtype=jnp.float32)
    target_mask3 = (jax.random.uniform(k8, (N3, H3, W3)) > 0.5).astype(jnp.float32)
    class_idx3 = jax.random.randint(k9, (N3,), 0, C3, dtype=jnp.int32)

    loss3 = dice_loss_forward(cls_score3, target_mask3, class_idx3, loss_weight=2.0)
    loss3 = jax.block_until_ready(loss3)
    ref3 = _reference(cls_score3, target_mask3, class_idx3, loss_weight=2.0)
    assert loss3.shape == (1,)
    assert jnp.allclose(loss3, ref3, atol=1e-5, rtol=1e-5), (loss3, ref3)

    print("KERNEL_OK")
</pallas_src>

<mosaic_0001>
module attributes {stable_mosaic.version = 11 : i64} {
  func.func @_dice_kernel(%arg0: i32, %arg1: memref<2xi32, #tpu.memory_space<smem>>, %arg2: memref<2x4x256xf32, #tpu.memory_space<any>>, %arg3: memref<2x256xf32, #tpu.memory_space<vmem>>, %arg4: memref<2x1xf32, #tpu.memory_space<vmem>>, %arg5: memref<2x256xf32, #tpu.memory_space<vmem>>, %arg6: memref<!tpu.dma_semaphore, #tpu.memory_space<semaphore_mem>>) attributes {dimension_semantics = [#tpu.dimension_semantics<parallel>], iteration_bounds = array<i64: 1>, scalar_prefetch = 1 : i64, scratch_operands = 2 : i64, tpu.core_type = #tpu.core_type<tc>, window_params = [{}, {transform_indices = @transform_1, window_bounds = array<i64: 2, 256>}, {transform_indices = @transform_2, window_bounds = array<i64: 2, 1>}]} {
    %c2_i32 = arith.constant 2 : i32
    %0 = arith.muli %arg0, %c2_i32 : i32
    %c0_i32 = arith.constant 0 : i32
    %c2_i32_0 = arith.constant 2 : i32
    %1 = arith.addi %c0_i32, %c2_i32_0 : i32
    %c1_i32 = arith.constant 1 : i32
    scf.for %arg7 = %c0_i32 to %1 step %c1_i32  : i32 {
      %26 = arith.addi %0, %arg7 : i32
      %c1_i32_17 = arith.constant 1 : i32
      %27 = arith.minsi %26, %c1_i32_17 : i32
      %28 = arith.index_cast %27 : i32 to index
      %29 = memref.load %arg1[%28] : memref<2xi32, #tpu.memory_space<smem>>
      %c0_i32_18 = arith.constant 0 : i32
      %30 = arith.maxsi %29, %c0_i32_18 : i32
      %c3_i32 = arith.constant 3 : i32
      %31 = arith.minsi %30, %c3_i32 : i32
      %c0_i32_19 = arith.constant 0 : i32
      %32 = tpu.memref_slice %arg2[%27, %31, %c0_i32_19] : memref<2x4x256xf32, #tpu.memory_space<any>> -> memref<1x1x256xf32, #tpu.memory_space<any>>
      %33 = tpu.memref_squeeze %32 : memref<1x1x256xf32, #tpu.memory_space<any>> -> memref<256xf32, #tpu.memory_space<any>>
      %c0_i32_20 = arith.constant 0 : i32
      %34 = tpu.memref_slice %arg5[%arg7, %c0_i32_20] : memref<2x256xf32, #tpu.memory_space<vmem>> -> memref<1x256xf32, #tpu.memory_space<vmem>>
      %35 = tpu.memref_squeeze %34 : memref<1x256xf32, #tpu.memory_space<vmem>> -> memref<256xf32, #tpu.memory_space<vmem>>
      tpu.enqueue_dma source(%33 : memref<256xf32, #tpu.memory_space<any>>) target(%35 : memref<256xf32, #tpu.memory_space<vmem>>) target_semaphore(%arg6 : memref<!tpu.dma_semaphore, #tpu.memory_space<semaphore_mem>>)
    }
    %c2_i32_1 = arith.constant 2 : i32
    %c0 = arith.constant 0 : index
    %c0_2 = arith.constant 0 : index
    %2 = vector.load %arg3[%c0, %c0_2] : memref<2x256xf32, #tpu.memory_space<vmem>>, vector<2x256xf32>
    %cst = arith.constant dense<0.000000e+00> : vector<2xf32>
    %3 = vector.multi_reduction <add>, %2, %cst [1] : vector<2x256xf32> to vector<2xf32>
    %4 = vector.shape_cast %3 : vector<2xf32> to vector<2x1xf32>
    %c0_i32_3 = arith.constant 0 : i32
    %c2_i32_4 = arith.constant 2 : i32
    %5 = arith.addi %c0_i32_3, %c2_i32_4 : i32
    %c1_i32_5 = arith.constant 1 : i32
    scf.for %arg7 = %c0_i32_3 to %5 step %c1_i32_5  : i32 {
      %c0_i32_17 = arith.constant 0 : i32
      %c0_i32_18 = arith.constant 0 : i32
      %c0_i32_19 = arith.constant 0 : i32
      %26 = tpu.memref_slice %arg2[%c0_i32_17, %c0_i32_18, %c0_i32_19] : memref<2x4x256xf32, #tpu.memory_space<any>> -> memref<1x1x256xf32, #tpu.memory_space<any>>
      %27 = tpu.memref_squeeze %26 : memref<1x1x256xf32, #tpu.memory_space<any>> -> memref<256xf32, #tpu.memory_space<any>>
      %c0_i32_20 = arith.constant 0 : i32
      %28 = tpu.memref_slice %arg5[%arg7, %c0_i32_20] : memref<2x256xf32, #tpu.memory_space<vmem>> -> memref<1x256xf32, #tpu.memory_space<vmem>>
      %29 = tpu.memref_squeeze %28 : memref<1x256xf32, #tpu.memory_space<vmem>> -> memref<256xf32, #tpu.memory_space<vmem>>
      tpu.wait_dma2 semaphore(%arg6 : memref<!tpu.dma_semaphore, #tpu.memory_space<semaphore_mem>>) src(%27 : memref<256xf32, #tpu.memory_space<any>>) dst(%29 : memref<256xf32, #tpu.memory_space<vmem>>)
    }
    %c2_i32_6 = arith.constant 2 : i32
    %c0_7 = arith.constant 0 : index
    %c0_8 = arith.constant 0 : index
    %6 = vector.load %arg5[%c0_7, %c0_8] : memref<2x256xf32, #tpu.memory_space<vmem>>, vector<2x256xf32>
    %7 = arith.negf %6 : vector<2x256xf32>
    %8 = math.exp %7 : vector<2x256xf32>
    %cst_9 = arith.constant 1.000000e+00 : f32
    %9 = vector.broadcast %cst_9 : f32 to vector<2x256xf32>
    %10 = arith.addf %9, %8 : vector<2x256xf32>
    %11 = arith.divf %9, %10 : vector<2x256xf32>
    %12 = arith.mulf %11, %2 : vector<2x256xf32>
    %cst_10 = arith.constant dense<0.000000e+00> : vector<2xf32>
    %13 = vector.multi_reduction <add>, %12, %cst_10 [1] : vector<2x256xf32> to vector<2xf32>
    %14 = vector.shape_cast %13 : vector<2xf32> to vector<2x1xf32>
    %cst_11 = arith.constant dense<0.000000e+00> : vector<2xf32>
    %15 = vector.multi_reduction <add>, %11, %cst_11 [1] : vector<2x256xf32> to vector<2xf32>
    %16 = vector.shape_cast %15 : vector<2xf32> to vector<2x1xf32>
    %cst_12 = arith.constant 2.000000e+00 : f32
    %17 = vector.broadcast %cst_12 : f32 to vector<2x1xf32>
    %18 = arith.mulf %17, %14 : vector<2x1xf32>
    %cst_13 = arith.constant 0.00999999977 : f32
    %19 = vector.broadcast %cst_13 : f32 to vector<2x1xf32>
    %20 = arith.addf %18, %19 : vector<2x1xf32>
    %21 = arith.addf %16, %4 : vector<2x1xf32>
    %cst_14 = arith.constant 0.00999999977 : f32
    %22 = vector.broadcast %cst_14 : f32 to vector<2x1xf32>
    %23 = arith.addf %21, %22 : vector<2x1xf32>
    %24 = arith.divf %20, %23 : vector<2x1xf32>
    %c0_15 = arith.constant 0 : index
    %c0_16 = arith.constant 0 : index
    %25 = vector.load %arg4[%c0_15, %c0_16] : memref<2x1xf32, #tpu.memory_space<vmem>>, vector<2x1xf32>
    tpu.vector_store %arg4[%c0_15, %c0_16], %24 {strides = array<i32>} : memref<2x1xf32, #tpu.memory_space<vmem>>, vector<2x1xf32>,
    return
  }
  func.func @transform_1(%arg0: i32, %arg1: memref<2xi32, #tpu.memory_space<smem>>) -> (i32, i32) {
    %c0_i32 = arith.constant 0 : i32
    %c0_i32_0 = arith.constant 0 : i32
    return %arg0, %c0_i32 : i32, i32
  }
  func.func @transform_2(%arg0: i32, %arg1: memref<2xi32, #tpu.memory_space<smem>>) -> (i32, i32) {
    %c0_i32 = arith.constant 0 : i32
    %c0_i32_0 = arith.constant 0 : i32
    return %arg0, %c0_i32 : i32, i32
  }
}

</mosaic_0001>

<llo_original>
// kernel: tpu_custom_call.1
$region0: #{tpu_custom_call.1}
  #allocation0 [shape = 'u32[]', space=smem, size = 0x4, offset = 0x4, fixed_abs, tag = 'smem constant byte address 0x4 - core index']
  #allocation1 [shape = 'u32[144,128]{1,0:T(1,128)}', space=vmem, size = 0x12000, scoped, tag = 'internal scratch']
  #allocation2 [shape = 'f32[2,256]{1,0:T(2,128)}', space=vmem, size = 0x800, scoped, tag = 'scratch operand']
  #allocation3 [shape = 's32[1]{0}', space=sflag, size = 0x4, scoped, tag = 'scratch operand']
  #allocation4 [shape = 's32[1]{0}', space=sflag, size = 0x4, scoped, tag = 'scoped memory for tpu_custom_call.1']
  #allocation5 [shape = 'u8[512]{0}', space=smem, size = 0x200, scoped, tag = 'prefetched SMEM operand 0']
  #allocation6 [shape = 's32[]', space=sflag, size = 0x4, offset = 0, fixed_abs, tag = 'sflag constant byte address 0x0 - dummy sync flag']
  %s0 = inlined_call_operand.hbm [shape: s32[2], index: 0, kind: input, shape index: {}]
  %s1 = inlined_call_operand.hbm [shape: f32[2,4,256], index: 1, kind: input, shape index: {}]
  %s2 = inlined_call_operand.vmem [shape: f32[2,256], index: 2, kind: input, shape index: {}]
  %s3 = inlined_call_operand.vmem [shape: f32[2,1], index: 3, kind: output, shape index: {}]
  %s4 = sld [smem:[#allocation0]]
  $region28: #{tpu_custom_call.1} parent=0
    _
  %s6 = ssub.s32 1, %s4
  %s7 = scalar_select 0, %s6, %s4
  %9 = dma.hbm_to_smem %s0, 16, [#allocation5], [#allocation4]
  %10 = dma.done [#allocation4], 16
  %11 = sfence
  // Predicated region
  $region2: #{tpu_custom_call.1} parent=0 // pred_check
    _
  $region3: #{tpu_custom_call.1} parent=0 // pred_check_branch
    %13 = sbr.rel (0) target = $region5
  $region4: #{tpu_custom_call.1} parent=0 // pred_region
    _
  $region5: #{tpu_custom_call.1} parent=0 // pred_fallthru
    _
  %s14 = smul.u32 0, 2
  loop: start=0, step=1, limit=2
  $region6: #{tpu_custom_call.1} parent=0 // loop_pre_header
    _
  $region7: #{tpu_custom_call.1} parent=0 // loop_header
    %s16 = sphi 0, %s20
    %p17 = scmp.ge.s32.totalorder %s16, 2
  $region8: #{tpu_custom_call.1} parent=0 // loop_header_branch
    %19 = sbr.rel (%p17) target = $region12
  $region9: #{tpu_custom_call.1} parent=0 // loop_body
    %s21 = sadd.s32 %s14, %s16
    %p22 = scmp.lt.s32.totalorder %s21, 1
    %s23 = scalar_select %p22, %s21, 1
    %s24 = sld [smem:[#allocation5 + %s23]]
    %p25 = scmp.gt.s32.totalorder %s24, 0
    %s26 = scalar_select %p25, %s24, 0
    %p27 = scmp.lt.s32.totalorder %s26, 3
    %s28 = scalar_select %p27, %s26, 3
    %s29 = sshrl.u32 %s28, 2
    %s30 = sand.u32 %s28, 3
    %s31 = smul.u32 %s29, 8
    %s32 = sadd.s32 %s30, %s31
    %s33 = smul.u32 %s23, 8
    %s34 = sadd.s32 %s32, %s33
    %s35 = smul.addr %s34, 16
    %s36 = scalar_lea.hbm %s1, %s35
    %s37 = sshrl.u32 %s16, 1
    %s38 = sand.u32 %s16, 1
    %s39 = smul.u32 %s37, 4
    %s40 = sadd.s32 %s38, %s39
    %s41 = scalar_lea.vmem [#allocation2], %s40
    %s43 = sshll.u32 %s41, 4
    %s44 = int_to_ptr.vmem [resolvable:$true] %s43
    %46 = dma.hbm_to_vmem [thread:$0]  %s36, 32, %s44, [#allocation3], 64, 32, 1
  $region10: #{tpu_custom_call.1} parent=0 // loop_footer
    %s20 = sadd.s32 1, %s16
  $region11: #{tpu_custom_call.1} parent=0 // loop_footer_branch
    %15 = sbr.rel target = $region7
  $region12: #{tpu_custom_call.1} parent=0 // loop_exit
    _
  %v47 = vld [vmem:[%s2] sm:$0xf]
  %v50 = vunpack.c.l.s4 1983009808
  %v51 = vunpack.c.0.s8 %v50
  %v52 = vlaneseq
  %v53 = vshrl.u32 %v52, 7
  %v54 = vsub.s32 %v51, %v53
  %v55 = vrot.slane %v47, %v54
  %v56 = vcombine.high %v55, %v55
  %vm59 = vcmask 1041408
  %v60 = vsel %vm59, %v55, 0.0
  %v61 = vsel %vm59, %v56, 0.0
  %v62 = vadd.f32 %v60, %v61
  %63 = vadd.xlane.f32.xlu0 %v62
  %v64 = vpop.xlane.xlu0 %63
  loop: start=0, step=1, limit=2
  $region13: #{tpu_custom_call.1} parent=0 // loop_pre_header
    _
  $region14: #{tpu_custom_call.1} parent=0 // loop_header
    %s66 = sphi 0, %s70
    %p67 = scmp.ge.s32.totalorder %s66, 2
  $region15: #{tpu_custom_call.1} parent=0 // loop_header_branch
    %69 = sbr.rel (%p67) target = $region19
  $region16: #{tpu_custom_call.1} parent=0 // loop_body
    %72 = dma.done [#allocation3], 32
  $region17: #{tpu_custom_call.1} parent=0 // loop_footer
    %s70 = sadd.s32 1, %s66
  $region18: #{tpu_custom_call.1} parent=0 // loop_footer_branch
    %65 = sbr.rel target = $region14
  $region19: #{tpu_custom_call.1} parent=0 // loop_exit
    _
  %v73 = vld [vmem:[#allocation2] sm:$0xf]
  %v74 = vxor.u32 %v73, 2147483648
  %v75 = vmul.f32 %v74, 1.442695
  %v76 = vpow.pop %v75
  %v77 = vadd.f32 %v76, 1.0
  %v78 = vrcp.pop %v77
  %v79 = vmul.f32 1.0, %v78
  %v80 = vmul.f32 %v79, %v47
  %v83 = vunpack.c.l.s4 1983009808
  %v84 = vunpack.c.0.s8 %v83
  %v85 = vlaneseq
  %v86 = vshrl.u32 %v85, 7
  %v87 = vsub.s32 %v84, %v86
  %v88 = vrot.slane %v80, %v87
  %v89 = vcombine.high %v88, %v88
  %v92 = vsel %vm59, %v88, 0.0
  %v93 = vsel %vm59, %v89, 0.0
  %v94 = vadd.f32 %v92, %v93
  %95 = vadd.xlane.f32.xlu0 %v94
  %v96 = vpop.xlane.xlu0 %95
  %v99 = vunpack.c.l.s4 1983009808
  %v100 = vunpack.c.0.s8 %v99
  %v101 = vlaneseq
  %v102 = vshrl.u32 %v101, 7
  %v103 = vsub.s32 %v100, %v102
  %v104 = vrot.slane %v79, %v103
  %v105 = vcombine.high %v104, %v104
  %v108 = vsel %vm59, %v104, 0.0
  %v109 = vsel %vm59, %v105, 0.0
  %v110 = vadd.f32 %v108, %v109
  %111 = vadd.xlane.f32.xlu0 %v110
  %v112 = vpop.xlane.xlu0 %111
  %v113 = vmul.f32 %v96, 2.0
  %v114 = vadd.f32 %v113, 0.01
  %v115 = vadd.f32 %v112, %v64
  %v116 = vadd.f32 %v115, 0.01
  %v117 = vrcp.pop %v116
  %v118 = vmul.f32 %v114, %v117
  %vm119 = vcmask 1024
  %120 = vst.msk [vmem:[%s3] sm:$0x3] %vm119, %v118
  // Predicated region
  $region20: #{tpu_custom_call.1} parent=0 // pred_check
    _
  $region21: #{tpu_custom_call.1} parent=0 // pred_check_branch
    %122 = sbr.rel (0) target = $region23
  $region22: #{tpu_custom_call.1} parent=0 // pred_region
    _
  $region23: #{tpu_custom_call.1} parent=0 // pred_fallthru
    _
  // Predicated region
  $region24: #{tpu_custom_call.1} parent=0 // pred_check
    _
  $region25: #{tpu_custom_call.1} parent=0 // pred_check_branch
    %124 = sbr.rel (0) target = $region27
  $region26: #{tpu_custom_call.1} parent=0 // pred_region
    _
  $region27: #{tpu_custom_call.1} parent=0 // pred_fallthru
    _
  %125 = vsyncmov [#allocation3]
  %s126 = vpop.sfrf %125
  %p127 = scmp.eq.s32.totalorder %s126, 0
  %p128 = pneg %p127
  %130 = shalt.err (%p128)

</llo_original>
